<compile_context>
chip_gen: v7x
topology: tpu7x:2x2x1
jax: 0.10.0
libtpu: 0.0.40
codegen_flags: <defaults>
</compile_context>

<pallas_src>
import functools

import jax
import jax.numpy as jnp
from jax.experimental import pallas as pl
from jax.experimental.pallas import tpu as pltpu


def _softmax_channels(x):
    # softmax over axis 0 (channels): one exact reciprocal per (spatial)
    # position + multiplies instead of per-element divides.
    m = jnp.max(x, axis=0, keepdims=True)
    e = jnp.exp(x - m)
    inv = pl.reciprocal(jnp.sum(e, axis=0, keepdims=True), approx=False)
    return e * inv


def _smooth_l1_partial(d):
    # smooth_l1(d, 0) with beta=1 and |d| <= 1  ==>  0.5 * d^2 (exact).
    return 0.5 * (d * d)


def _prl_kernel_flat(x_ref, out_ref, *, h, w):
    # x_ref  : (1, C, Lpad) block, Lpad = round_up(h*w, 128); one batch elem.
    # out_ref: (1, 8, 128) lane-dense partial-sum tile owned by this program.
    x = x_ref[0].astype(jnp.float32)                 # (C, Lpad)
    p = _softmax_channels(x)
    pc = p[1:]                                       # drop channel 0
    lm = (h - 1) * w
    d = pc[:, w:w + lm] - pc[:, :lm]                 # row i+1 minus row i
    partial = jnp.sum(_smooth_l1_partial(d))
    out_ref[0] = jnp.full((8, 128), partial, dtype=jnp.float32)


def _prl_kernel_tiled(x_ref, out_ref):
    # x_ref  : (1, C, H, TW) block (one batch element, one W tile).
    # out_ref: (1, 8, 128) lane-dense partial-sum tile owned by this program.
    x = x_ref[0].astype(jnp.float32)                 # (C, H, TW)
    p = _softmax_channels(x)
    pc = p[1:]                                       # (C-1, H, TW)
    d = pc[:, 1:, :] - pc[:, :-1, :]                 # (C-1, H-1, TW)
    partial = jnp.sum(_smooth_l1_partial(d))
    out_ref[0] = jnp.full((8, 128), partial, dtype=jnp.float32)


def _pick_tile_w(c, h, w):
    # Largest 128-multiple tile whose f32 input block (~2 MiB budget) keeps
    # double-buffered DMA + softmax/diff intermediates inside the v5e 16 MiB
    # default scoped VMEM (and leaves ample headroom on v7x's 64 MiB).
    budget_elems = (2 * 1024 * 1024) // 4
    divisors = [tw for tw in (512, 384, 256, 128) if w % tw == 0]
    for tw in divisors:
        if c * h * tw <= budget_elems:
            return tw
    if divisors:
        return divisors[-1]
    return w  # awkward width: fall back to full-width blocks


def parsing_relation_loss(logits):
    """logits: (n, c, h, w) array. Returns scalar f32 loss (smooth_l1 mean)."""
    n, c, h, w = logits.shape
    count = n * (c - 1) * (h - 1) * w

    if w < 128:
        # Lane-dense path: flatten (h, w) onto lanes, pad to 128 multiple.
        l = h * w
        lpad = ((l + 127) // 128) * 128
        xf = logits.reshape(n, c, l)
        if lpad != l:
            # Zero padding is benign: padded columns softmax to 1/c and are
            # never read by the row-diff slices (indices stay < h*w).
            xf = jnp.pad(xf, ((0, 0), (0, 0), (0, lpad - l)))
        partials = pl.pallas_call(
            functools.partial(_prl_kernel_flat, h=h, w=w),
            out_shape=jax.ShapeDtypeStruct((n, 8, 128), jnp.float32),
            grid_spec=pltpu.PrefetchScalarGridSpec(
                num_scalar_prefetch=0,
                grid=(n,),
                in_specs=[pl.BlockSpec((1, c, lpad), lambda i: (i, 0, 0))],
                out_specs=pl.BlockSpec((1, 8, 128), lambda i: (i, 0, 0)),
            ),
            compiler_params=pltpu.CompilerParams(
                dimension_semantics=("parallel",)),
        )(xf)
    else:
        # W-tiled path: the row diff runs along H, so W tiles need no halo.
        tw = _pick_tile_w(c, h, w)
        n_wt = w // tw
        partials = pl.pallas_call(
            _prl_kernel_tiled,
            out_shape=jax.ShapeDtypeStruct((n * n_wt, 8, 128), jnp.float32),
            grid_spec=pltpu.PrefetchScalarGridSpec(
                num_scalar_prefetch=0,
                grid=(n, n_wt),
                in_specs=[pl.BlockSpec((1, c, h, tw),
                                       lambda i, j: (i, 0, 0, j))],
                out_specs=pl.BlockSpec((1, 8, 128),
                                       lambda i, j: (i * n_wt + j, 0, 0)),
            ),
            compiler_params=pltpu.CompilerParams(
                dimension_semantics=("parallel", "parallel")),
        )(logits)

    total = jnp.sum(partials[:, 0, 0])
    return (total / jnp.float32(count)).astype(jnp.float32)


def _reference(logits):
    # pure-JAX reference mirroring the PyTorch module
    p = jax.nn.softmax(logits.astype(jnp.float32), axis=1)
    d = jnp.abs(p[:, 1:, :-1, :] - p[:, 1:, 1:, :])
    sl1 = jnp.where(d < 1.0, 0.5 * d * d, d - 0.5)
    return jnp.mean(sl1)


if __name__ == "__main__":
    key = jax.random.PRNGKey(0)

    # Small-W (lane-densified) path: the module's typical shape.
    logits_small = jax.random.normal(key, (2, 4, 16, 16), dtype=jnp.float32)
    loss_small = jax.block_until_ready(parsing_relation_loss(logits_small))
    ref_small = jax.block_until_ready(_reference(logits_small))
    assert jnp.allclose(loss_small, ref_small, atol=1e-5, rtol=1e-5), (
        loss_small, ref_small)

    # Wide-W (W-tiled, multi-program, parallel grid) path.
    logits_wide = jax.random.normal(jax.random.fold_in(key, 1),
                                    (2, 3, 8, 640), dtype=jnp.float32)
    loss_wide = jax.block_until_ready(parsing_relation_loss(logits_wide))
    ref_wide = jax.block_until_ready(_reference(logits_wide))
    assert jnp.allclose(loss_wide, ref_wide, atol=1e-5, rtol=1e-5), (
        loss_wide, ref_wide)

    print("KERNEL_OK")
</pallas_src>

<mosaic_0001>
module attributes {stable_mosaic.version = 11 : i64} {
  func.func @_prl_kernel_flat(%arg0: i32, %arg1: memref<1x4x256xf32, #tpu.memory_space<vmem>>, %arg2: memref<1x8x128xf32, #tpu.memory_space<vmem>>) attributes {dimension_semantics = [#tpu.dimension_semantics<parallel>], iteration_bounds = array<i64: 2>, scalar_prefetch = 0 : i64, scratch_operands = 0 : i64, tpu.core_type = #tpu.core_type<tc>, window_params = [{transform_indices = @transform_0, window_bounds = array<i64: 1, 4, 256>}, {transform_indices = @transform_1, window_bounds = array<i64: 1, 8, 128>}]} {
    %c0 = arith.constant 0 : index
    %c0_0 = arith.constant 0 : index
    %c0_1 = arith.constant 0 : index
    %0 = vector.load %arg1[%c0, %c0_0, %c0_1] : memref<1x4x256xf32, #tpu.memory_space<vmem>>, vector<1x4x256xf32>
    %1 = vector.shape_cast %0 : vector<1x4x256xf32> to vector<4x256xf32>
    %cst = arith.constant dense<0xFF800000> : vector<256xf32>
    %2 = vector.multi_reduction <maximumf>, %1, %cst [0] : vector<4x256xf32> to vector<256xf32>
    %3 = vector.shape_cast %2 : vector<256xf32> to vector<1x256xf32>
    %4 = vector.broadcast %3 : vector<1x256xf32> to vector<4x256xf32>
    %5 = arith.subf %1, %4 : vector<4x256xf32>
    %6 = math.exp %5 : vector<4x256xf32>
    %cst_2 = arith.constant dense<0.000000e+00> : vector<256xf32>
    %7 = vector.multi_reduction <add>, %6, %cst_2 [0] : vector<4x256xf32> to vector<256xf32>
    %8 = vector.shape_cast %7 : vector<256xf32> to vector<1x256xf32>
    %9 = tpu.reciprocal %8 : vector<1x256xf32> -> vector<1x256xf32>
    %10 = vector.broadcast %9 : vector<1x256xf32> to vector<4x256xf32>
    %11 = arith.mulf %6, %10 : vector<4x256xf32>
    %12 = vector.extract_strided_slice %11 {offsets = [1, 0], sizes = [3, 256], strides = [1, 1]} : vector<4x256xf32> to vector<3x256xf32>
    %13 = vector.extract_strided_slice %12 {offsets = [0, 16], sizes = [3, 240], strides = [1, 1]} : vector<3x256xf32> to vector<3x240xf32>
    %14 = vector.extract_strided_slice %12 {offsets = [0, 0], sizes = [3, 240], strides = [1, 1]} : vector<3x256xf32> to vector<3x240xf32>
    %15 = arith.subf %13, %14 : vector<3x240xf32>
    %16 = arith.mulf %15, %15 : vector<3x240xf32>
    %cst_3 = arith.constant 5.000000e-01 : f32
    %17 = vector.broadcast %cst_3 : f32 to vector<3x240xf32>
    %18 = arith.mulf %17, %16 : vector<3x240xf32>
    %19 = vector.shape_cast %18 : vector<3x240xf32> to vector<1x3x240xf32>
    %cst_4 = arith.constant dense<0.000000e+00> : vector<1xf32>
    %20 = vector.multi_reduction <add>, %19, %cst_4 [1, 2] : vector<1x3x240xf32> to vector<1xf32>
    %21 = vector.shape_cast %20 : vector<1xf32> to vector<1x1x1xf32>
    %22 = vector.extract %21[0, 0, 0] : f32 from vector<1x1x1xf32>
    %23 = vector.broadcast %22 : f32 to vector<8x128xf32>
    %c0_5 = arith.constant 0 : index
    %c0_6 = arith.constant 0 : index
    %c0_7 = arith.constant 0 : index
    %24 = vector.load %arg2[%c0_5, %c0_6, %c0_7] : memref<1x8x128xf32, #tpu.memory_space<vmem>>, vector<1x8x128xf32>
    %25 = vector.shape_cast %24 : vector<1x8x128xf32> to vector<8x128xf32>
    %26 = vector.shape_cast %23 : vector<8x128xf32> to vector<1x8x128xf32>
    tpu.vector_store %arg2[%c0_5, %c0_6, %c0_7], %26 {strides = array<i32>} : memref<1x8x128xf32, #tpu.memory_space<vmem>>, vector<1x8x128xf32>,
    return
  }
  func.func @transform_0(%arg0: i32) -> (i32, i32, i32) {
    %c0_i32 = arith.constant 0 : i32
    %c0_i32_0 = arith.constant 0 : i32
    %c0_i32_1 = arith.constant 0 : i32
    return %arg0, %c0_i32, %c0_i32_0 : i32, i32, i32
  }
  func.func @transform_1(%arg0: i32) -> (i32, i32, i32) {
    %c0_i32 = arith.constant 0 : i32
    %c0_i32_0 = arith.constant 0 : i32
    %c0_i32_1 = arith.constant 0 : i32
    return %arg0, %c0_i32, %c0_i32_0 : i32, i32, i32
  }
}

</mosaic_0001>

<llo_original>
// kernel: tpu_custom_call.1
$region0: #{tpu_custom_call.1}
  #allocation0 [shape = 'u32[]', space=smem, size = 0x4, offset = 0x4, fixed_abs, tag = 'smem constant byte address 0x4 - core index']
  #allocation1 [shape = 'u32[144,128]{1,0:T(1,128)}', space=vmem, size = 0x12000, scoped, tag = 'internal scratch']
  %s0 = inlined_call_operand.hbm [shape: f32[2,4,256], index: 0, kind: input, shape index: {}]
  %s1 = inlined_call_operand.hbm [shape: f32[2,8,128], index: 1, kind: output, shape index: {}]
  %s2 = sld [smem:[#allocation0]]
  $region41: #{tpu_custom_call.1} parent=0
    _
  %s4 = ssub.s32 1, %s2
  %s5 = scalar_select 0, %s4, %s2
  $region1: #{tpu_custom_call.1} parent=0
    #allocation2 [shape = 'u8[8192]{0}', space=vmem, size = 0x2000, scoped, tag = 'input window, operand 0']
    #allocation3 [shape = 's32[2]{0}', space=sflag, size = 0x8, scoped, tag = 'scoped memory for tpu_custom_call.1']
    #allocation4 [shape = 's32[2]{0}', space=sflag, size = 0x8, scoped, tag = 'scoped memory for tpu_custom_call.1']
    #allocation5 [shape = 'u8[8192]{0}', space=vmem, size = 0x2000, scoped, tag = 'output window, operand 0']
    %6 = vsyncpa [#allocation3], 0
    %s7 = scalar_lea.sflag [#allocation3], 1
    %8 = vsyncpa %s7, 0
    %9 = vsyncpa [#allocation4], 0
    %s10 = scalar_lea.sflag [#allocation4], 1
    %11 = vsyncpa %s10, 0
    loop: start=0, step=1, limit=4
    $region2: #{tpu_custom_call.1} parent=1 // loop_pre_header
      _
    $region3: #{tpu_custom_call.1} parent=1 // loop_header
      %s13 = sphi 0, %s17
      %p14 = scmp.ge.s32.totalorder %s13, 4
      %s23 = sphi 0, %s25
      %s26 = sphi 0, %s23
      %s27 = sphi 0, %s26
      %s43 = sphi 0, %s27
      %s49 = sphi 0, %s51
      %s52 = sphi 0, %s49
      %s53 = sphi 0, %s52
      %s69 = sphi 0, %s53
    $region4: #{tpu_custom_call.1} parent=1 // loop_header_branch
      %16 = sbr.rel (%p14) target = $region8
    $region5: #{tpu_custom_call.1} parent=1 // loop_body
      %s18 = ssub.s32 %s13, 1
      %s19 = ssub.s32 %s13, 2
      %s20 = sadd.s32 %s13, 1
      %s21 = ssub.s32 %s13, %s20
      %p22 = scmp.eq.s32.totalorder %s21, 0
      %s24 = sadd.s32 %s23, 1
      %s25 = scalar_select %p22, %s23, %s24
      %p28 = pneg %p22
      %p29 = scmp.eq.s32.totalorder %s13, 1
      %p30 = por %p28, %p29
      %p31 = scmp.ne.s32.totalorder %s23, %s26
      %p32 = scmp.eq.s32.totalorder %s13, 0
      %p33 = por %p31, %p32
      %p34 = scmp.ne.s32.totalorder %s23, %s26
      %p35 = scmp.eq.s32.totalorder %s18, 1
      %p36 = por %p34, %p35
      %p37 = scmp.ne.s32.totalorder %s26, %s27
      %p38 = scmp.eq.s32.totalorder %s18, 0
      %p39 = por %p37, %p38
      %p40 = scmp.ne.s32.totalorder %s26, %s27
      %p41 = scmp.eq.s32.totalorder %s19, 1
      %p42 = por %p40, %p41
      %p44 = scmp.ne.s32.totalorder %s27, %s43
      %p45 = scmp.eq.s32.totalorder %s19, 0
      %p46 = por %p44, %p45
      %s47 = ssub.s32 %s13, %s20
      %p48 = scmp.eq.s32.totalorder %s47, 0
      %s50 = sadd.s32 %s49, 1
      %s51 = scalar_select %p48, %s49, %s50
      %p54 = pneg %p48
      %p55 = scmp.eq.s32.totalorder %s13, 1
      %p56 = por %p54, %p55
      %p57 = scmp.ne.s32.totalorder %s49, %s52
      %p58 = scmp.eq.s32.totalorder %s13, 0
      %p59 = por %p57, %p58
      %p60 = scmp.ne.s32.totalorder %s49, %s52
      %p61 = scmp.eq.s32.totalorder %s18, 1
      %p62 = por %p60, %p61
      %p63 = scmp.ne.s32.totalorder %s52, %s53
      %p64 = scmp.eq.s32.totalorder %s18, 0
      %p65 = por %p63, %p64
      %p66 = scmp.ne.s32.totalorder %s52, %s53
      %p67 = scmp.eq.s32.totalorder %s19, 1
      %p68 = por %p66, %p67
      %p70 = scmp.ne.s32.totalorder %s53, %s69
      %p71 = scmp.eq.s32.totalorder %s19, 0
      %p72 = por %p70, %p71
      %p73 = scmp.le.s32.totalorder 1, %s13
      %p74 = scmp.lt.s32.totalorder %s13, 3
      %p75 = pnand %p73, %p74
      %p76 = pneg %p75
      // Predicated region
      $region9: #{tpu_custom_call.1} parent=5 // pred_check
        _
      $region10: #{tpu_custom_call.1} parent=5 // pred_check_branch
        %78 = sbr.rel (%p75) target = $region12
      $region11: #{tpu_custom_call.1} parent=5 // pred_region
        %s79 = ssub.s32 %s13, 1
      $region12: #{tpu_custom_call.1} parent=5 // pred_fallthru
        _
      %p80 = scmp.lt.s32.totalorder %s13, 2
      // Predicated region
      $region13: #{tpu_custom_call.1} parent=5 // pred_check
        %p81 = pneg %p80
      $region14: #{tpu_custom_call.1} parent=5 // pred_check_branch
        %83 = sbr.rel (%p81) target = $region16
      $region15: #{tpu_custom_call.1} parent=5 // pred_region
        // Predicated region
        $region17: #{tpu_custom_call.1} parent=15 // pred_check
          %p84 = pneg %p33
        $region18: #{tpu_custom_call.1} parent=15 // pred_check_branch
          %86 = sbr.rel (%p84) target = $region20
        $region19: #{tpu_custom_call.1} parent=15 // pred_region
          %s87 = sand.u32 %s23, 1
          %s88 = scalar_lea.sflag [#allocation3], %s87
          %s89 = sand.u32 %s23, 1
          %s90 = smul.addr %s89, 8
          %s91 = scalar_lea.vmem [#allocation2], %s90
          %s93 = ssub.s32 128, 128
          %94 = vsyncadd %s88, %s93
          %s95 = smul.addr %s13, 2
          %s96 = smul.addr %s95, 64
          %s97 = scalar_lea.hbm %s0, %s96
          %s99 = sshll.u32 %s91, 4
          %s100 = int_to_ptr.vmem [resolvable:$true] %s99
          %102 = dma.hbm_to_vmem [thread:$0]  %s97, 128, %s100, %s88
        $region20: #{tpu_custom_call.1} parent=15 // pred_fallthru
          _
      $region16: #{tpu_custom_call.1} parent=5 // pred_fallthru
        _
      %p103 = scmp.le.s32.totalorder 1, %s13
      %p104 = scmp.lt.s32.totalorder %s13, 3
      %p105 = pnand %p103, %p104
      %p106 = pneg %p105
      // Predicated region
      $region21: #{tpu_custom_call.1} parent=5 // pred_check
        _
      $region22: #{tpu_custom_call.1} parent=5 // pred_check_branch
        %108 = sbr.rel (%p105) target = $region24
      $region23: #{tpu_custom_call.1} parent=5 // pred_region
        %s109 = ssub.s32 %s13, 1
        %s110 = sand.u32 %s26, 1
        %s111 = scalar_lea.sflag [#allocation3], %s110
        %s112 = sand.u32 %s26, 1
        %s113 = smul.addr %s112, 8
        %s114 = scalar_lea.vmem [#allocation2], %s113
        // Predicated region
        $region25: #{tpu_custom_call.1} parent=23 // pred_check
          %p115 = pneg %p39
        $region26: #{tpu_custom_call.1} parent=23 // pred_check_branch
          %117 = sbr.rel (%p115) target = $region28
        $region27: #{tpu_custom_call.1} parent=23 // pred_region
          %118 = dma.done %s111, 128
        $region28: #{tpu_custom_call.1} parent=23 // pred_fallthru
          _
        %s119 = sand.u32 %s26, 1
        %s120 = scalar_lea.sflag [#allocation3], %s119
        %s121 = sand.u32 %s26, 1
        %s122 = smul.addr %s121, 8
        %s123 = scalar_lea.vmem [#allocation2], %s122
        %p124 = pneg %p39
        %p125 = pneg %p36
        %p126 = pneg %p65
        %p127 = pneg %p62
        %s128 = sand.u32 %s52, 1
        %s129 = scalar_lea.sflag [#allocation4], %s128
        %s130 = sand.u32 %s52, 1
        %s131 = smul.addr %s130, 8
        %s132 = scalar_lea.vmem [#allocation5], %s131
        %v133 = vld [vmem:[%s114] sm:$0xff]
        %v135 = vcombine.high %v133, %v133
        %vm137 = vcmask 1043456
        %v138 = vsel %vm137, %v133, -inf
        %v139 = vrot.slane %v138, 4
        %v140 = vmax.f32 %v138, %v139
        %v141 = vrot.slane %v140, 2
        %v142 = vmax.f32 %v140, %v141
        %v143 = vrot.slane %v142, 1
        %v144 = vmax.f32 %v142, %v143
        %v145 = vsel %vm137, %v135, -inf
        %v146 = vrot.slane %v145, 4
        %v147 = vmax.f32 %v145, %v146
        %v148 = vrot.slane %v147, 2
        %v149 = vmax.f32 %v147, %v148
        %v150 = vrot.slane %v149, 1
        %v151 = vmax.f32 %v149, %v150
        %v154 = vcombine.low %v144, %v151
        %v156 = vsub.f32 %v133, %v154
        %v157 = vmul.f32 %v156, 1.442695
        %v158 = vpow.pop %v157
        %v160 = vcombine.high %v158, %v158
        %v162 = vsel %vm137, %v158, 0.0
        %v163 = vrot.slane %v162, 4
        %v164 = vadd.f32 %v162, %v163
        %v165 = vrot.slane %v164, 2
        %v166 = vadd.f32 %v164, %v165
        %v167 = vrot.slane %v166, 1
        %v168 = vadd.f32 %v166, %v167
        %v169 = vsel %vm137, %v160, 0.0
        %v170 = vrot.slane %v169, 4
        %v171 = vadd.f32 %v169, %v170
        %v172 = vrot.slane %v171, 2
        %v173 = vadd.f32 %v171, %v172
        %v174 = vrot.slane %v173, 1
        %v175 = vadd.f32 %v173, %v174
        %v176 = vrcp.pop %v168
        %v177 = vrcp.pop %v175
        %v180 = vcombine.low %v176, %v177
        %v182 = vmul.f32 %v158, %v180
        %184 = vrot.lane.b32.xlu0 %v182, 16
        %v185 = vpop.permute.xlu0 %184
        %v186 = vrot.slane %v185, 4
        %vm187 = vcmask 130048
        %v188 = vsel %vm187, %v186, %v185
        %v190 = vsub.f32 %v182, %v188
        %v191 = vmul.f32 %v190, %v190
        %v192 = vmul.f32 %v191, 0.5
        %v194 = vcombine.high %v192, %v192
        %v195 = vrot.slane %v192, 1
        %v196 = vrot.slane %v194, 1
        %197 = vrot.lane.b32.xlu0 %v195, 112
        %v198 = vpop.permute.xlu0 %197
        %199 = vrot.lane.b32.xlu0 %v196, 112
        %v200 = vpop.permute.xlu0 %199
        %vm201 = vcmask 916480
        %v202 = vsel %vm201, %v198, %v200
        %vm205 = vcmask 1042432
        %v206 = vsel %vm205, %v202, 0.0
        %vm207 = vcmask 911360
        %v208 = vsel %vm207, %v200, 0.0
        %v209 = vadd.f32 %v206, %v208
        %210 = vadd.xlane.f32.xlu0 %v209
        %v211 = vpop.xlane.xlu0 %210
        %v212 = vrot.slane %v211, 4
        %v213 = vadd.f32 %v211, %v212
        %v214 = vrot.slane %v213, 2
        %v215 = vadd.f32 %v213, %v214
        %v216 = vrot.slane %v215, 1
        %v217 = vadd.f32 %v215, %v216
        %s218 = vtos %v217
        %v219 = vstv %s218
        %220 = vst [vmem:[%s132] sm:$0xff] %v219
        %s221 = sand.u32 %s52, 1
        %s222 = scalar_lea.sflag [#allocation4], %s221
        %s223 = sand.u32 %s52, 1
        %s224 = smul.addr %s223, 8
        %s225 = scalar_lea.vmem [#allocation5], %s224
        // Predicated region
        $region29: #{tpu_custom_call.1} parent=23 // pred_check
          %p226 = pneg %p62
        $region30: #{tpu_custom_call.1} parent=23 // pred_check_branch
          %228 = sbr.rel (%p226) target = $region32
        $region31: #{tpu_custom_call.1} parent=23 // pred_region
          %s230 = ssub.s32 128, 128
          %231 = vsyncadd %s222, %s230
          %s232 = smul.addr %s18, 128
          %s233 = scalar_lea.hbm %s1, %s232
          %s235 = sshll.u32 %s225, 4
          %s236 = int_to_ptr.vmem [resolvable:$true] %s235
          %238 = dma.vmem_to_hbm [thread:$0]  %s236, 128, %s233, %s222
        $region32: #{tpu_custom_call.1} parent=23 // pred_fallthru
          _
      $region24: #{tpu_custom_call.1} parent=5 // pred_fallthru
        _
      %p239 = scmp.le.s32.totalorder 2, %s13
      // Predicated region
      $region33: #{tpu_custom_call.1} parent=5 // pred_check
        %p240 = pneg %p239
      $region34: #{tpu_custom_call.1} parent=5 // pred_check_branch
        %242 = sbr.rel (%p240) target = $region36
      $region35: #{tpu_custom_call.1} parent=5 // pred_region
        %s243 = ssub.s32 %s13, 2
        // Predicated region
        $region37: #{tpu_custom_call.1} parent=35 // pred_check
          %p244 = pneg %p68
        $region38: #{tpu_custom_call.1} parent=35 // pred_check_branch
          %246 = sbr.rel (%p244) target = $region40
        $region39: #{tpu_custom_call.1} parent=35 // pred_region
          %s247 = sand.u32 %s53, 1
          %s248 = scalar_lea.sflag [#allocation4], %s247
          %s249 = sand.u32 %s53, 1
          %s250 = smul.addr %s249, 8
          %s251 = scalar_lea.vmem [#allocation5], %s250
          %252 = dma.done %s248, 128
        $region40: #{tpu_custom_call.1} parent=35 // pred_fallthru
          _
      $region36: #{tpu_custom_call.1} parent=5 // pred_fallthru
        _
    $region6: #{tpu_custom_call.1} parent=1 // loop_footer
      %s17 = sadd.s32 1, %s13
    $region7: #{tpu_custom_call.1} parent=1 // loop_footer_branch
      %12 = sbr.rel target = $region3
    $region8: #{tpu_custom_call.1} parent=1 // loop_exit
      _
    %253 = vsyncpa [#allocation3], 1
    %s254 = scalar_lea.sflag [#allocation3], 1
    %255 = vsyncpa %s254, 1
    %256 = vsyncpa [#allocation4], 1
    %s257 = scalar_lea.sflag [#allocation4], 1
    %258 = vsyncpa %s257, 1

</llo_original>
